<compile_context>
chip_gen: v7x
topology: tpu7x:2x2x1
jax: 0.10.0
libtpu: 0.0.40
codegen_flags: <defaults>
</compile_context>

<pallas_src>
import functools

import jax
import jax.numpy as jnp
from jax import lax
from jax.experimental import pallas as pl
from jax.experimental.pallas import tpu as pltpu

EPS = 1e-5


# ----------------------------- helpers ---------------------------------------

def _cdiv(a, b):
    return -(-a // b)


def _round_up(x, m):
    return _cdiv(x, m) * m


def _sublane_multiple(itemsize):
    # f32 -> 8, bf16 -> 16, int8/fp8 -> 32 packed rows per sublane tile.
    return max(8, 32 // max(1, itemsize))


@functools.lru_cache(maxsize=None)
def _hw_budgets():
    """(target_block_bytes, vmem_limit_bytes) per generation."""
    vmem = None
    try:
        info = pltpu.get_tpu_info()
        for name in ("vmem_capacity_bytes", "vmem_bytes", "vmem_size_bytes"):
            v = getattr(info, name, None)
            if isinstance(v, int) and v > 0:
                vmem = v
                break
    except Exception:
        vmem = None
    if vmem is None or vmem <= 0:
        vmem = 64 * 1024 * 1024  # assume the smallest (v7x per-TC)
    if vmem >= 96 * 1024 * 1024:
        # v5e / v6e (128 MiB): bigger blocks amortize per-step overhead.
        return 6 * 1024 * 1024, 80 * 1024 * 1024
    # v7x (64 MiB): 4 MiB blocks, 48 MiB limit leaves headroom for
    # 2x(in+out) double buffers plus the in-kernel f32 temporaries.
    return 4 * 1024 * 1024, 48 * 1024 * 1024


def _row_block(r, l, itemsize, target_bytes):
    """Row-block size: multiple of the sublane packing (or full r), ~target bytes,
    split so the 1-D grid has >= 2 steps when possible (v7x megacore)."""
    sub = _sublane_multiple(itemsize)
    rows = max(sub, (target_bytes // max(1, l * itemsize)) // sub * sub)
    if rows >= r:
        rows = _round_up(_cdiv(r, 2), sub) if r >= 2 * sub else r
    return min(rows, r)


# ----------------------------- row kernels ------------------------------------

def _make_instance_kernel(l_true):
    # nn.InstanceNorm{1,2}d defaults: affine=False, eps=1e-5, biased variance.
    inv_l = 1.0 / float(l_true)

    def kernel(x_ref, o_ref):
        x = x_ref[...].astype(jnp.float32)                     # (tr, L)
        mean = jnp.sum(x, axis=1, keepdims=True) * inv_l
        d = x - mean
        var = jnp.sum(d * d, axis=1, keepdims=True) * inv_l
        o_ref[...] = (d * lax.rsqrt(var + EPS)).astype(o_ref.dtype)

    return kernel


def _make_frn_kernel(l_true):
    # FilterResponseNorm: nu2 = E[x^2] over spatial; params packed per-row.
    inv_l = 1.0 / float(l_true)

    def kernel(x_ref, p_ref, o_ref):
        x = x_ref[...].astype(jnp.float32)                     # (tr, L)
        p = p_ref[...]                                         # (tr, 3) f32
        scale, bias, tau = p[:, 0:1], p[:, 1:2], p[:, 2:3]
        nu2 = jnp.sum(x * x, axis=1, keepdims=True) * inv_l
        y = x * lax.rsqrt(nu2 + EPS) * scale + bias
        o_ref[...] = jnp.maximum(y, tau).astype(o_ref.dtype)

    return kernel


def _make_embed_kernel(l_true):
    # EmbedNorm: torch.std_mean (unbiased std), out = (x-mean)/(std+eps)*scale+bias.
    inv_l = 1.0 / float(l_true)
    # PyTorch std with correction=1 is NaN for a single element; reproduce that.
    inv_lm1 = (1.0 / float(l_true - 1)) if l_true > 1 else float("nan")

    def kernel(x_ref, p_ref, o_ref):
        x = x_ref[...].astype(jnp.float32)                     # (tr, L)
        p = p_ref[...]                                         # (tr, 2) f32
        scale, bias = p[:, 0:1], p[:, 1:2]
        mean = jnp.sum(x, axis=1, keepdims=True) * inv_l
        d = x - mean
        std_u = jnp.sqrt(jnp.sum(d * d, axis=1, keepdims=True) * inv_lm1)
        # Exact (non-approx) reciprocal: kernel is HBM-bound, keep full accuracy.
        inv = pl.reciprocal(std_u + EPS)
        o_ref[...] = (d * inv * scale + bias).astype(o_ref.dtype)

    return kernel


def _affine_kernel(x_ref, p_ref, o_ref):
    # Per-row affine y = x * a + b  (batch_norm normalize pass).
    x = x_ref[...].astype(jnp.float32)                         # (tr, L)
    p = p_ref[...]                                             # (tr, 2) f32
    o_ref[...] = (x * p[:, 0:1] + p[:, 1:2]).astype(o_ref.dtype)


# ----------------------------- row-kernel driver ------------------------------

def _run_row_kernel(kernel, x_rows, packed_params=None, *, flops_per_elem=6,
                    transcendentals_per_row=1, target_block_bytes=None):
    """Stream rows (R, L) through `kernel`, tiling over rows only (no padding)."""
    r, l = x_rows.shape
    itemsize = jnp.dtype(x_rows.dtype).itemsize
    tgt, vmem_limit = _hw_budgets()
    if target_block_bytes is not None:
        tgt = target_block_bytes

    tr = _row_block(r, l, itemsize, tgt)
    x_spec = pl.BlockSpec((tr, l), lambda i: (i, 0))

    in_arrays = [x_rows]
    in_specs = [x_spec]
    if packed_params is not None:
        k = packed_params.shape[-1]
        in_arrays.append(packed_params.astype(jnp.float32))
        in_specs.append(pl.BlockSpec((tr, k), lambda i: (i, 0)))

    cost = pl.CostEstimate(
        flops=int(flops_per_elem * r * l),
        transcendentals=int(transcendentals_per_row * r),
        bytes_accessed=int(2 * r * l * itemsize),
    )
    return pl.pallas_call(
        kernel,
        grid=(_cdiv(r, tr),),
        in_specs=in_specs,
        out_specs=x_spec,
        out_shape=jax.ShapeDtypeStruct((r, l), x_rows.dtype),
        compiler_params=pltpu.CompilerParams(
            dimension_semantics=("parallel",),
            vmem_limit_bytes=vmem_limit),
        cost_estimate=cost,
    )(*in_arrays)


# ----------------------------- batch-norm stats pass --------------------------

def _make_bn_stats_kernel(l_true, tl):
    mask_tail = (l_true % tl) != 0

    def kernel(x_ref, s_ref):
        @pl.when(pl.program_id(1) == 0)
        def _():
            s_ref[...] = jnp.zeros_like(s_ref)

        x = x_ref[...].astype(jnp.float32)                     # (N, tc, tl)
        if mask_tail:
            li = lax.broadcasted_iota(jnp.int32, x.shape, 2) + pl.program_id(1) * tl
            x = jnp.where(li < l_true, x, 0.0)
        s = jnp.sum(x, axis=(0, 2))                            # (tc,)
        sq = jnp.sum(x * x, axis=(0, 2))                       # (tc,)
        s_ref[...] += jnp.stack([s, sq], axis=-1)              # (tc, 2)

    return kernel


def _bn_channel_stats(x_ncl, target_block_bytes=None):
    """Per-channel [sum, sum-of-squares] over (N, L), returned as (C, 2) f32."""
    n, c, l = x_ncl.shape
    itemsize = jnp.dtype(x_ncl.dtype).itemsize
    tgt, vmem_limit = _hw_budgets()
    if target_block_bytes is not None:
        tgt = target_block_bytes
    sub = _sublane_multiple(itemsize)

    # Choose the L tile first with a minimal channel tile, then grow channels.
    tc_min = min(c, sub)
    bytes_per_lane = max(1, n * tc_min * itemsize)
    if bytes_per_lane * l <= tgt:
        tl = l
    else:
        tl = max(128, (tgt // bytes_per_lane) // 128 * 128)
        if tl >= l:
            tl = l
    bytes_per_chan = max(1, n * tl * itemsize)
    tc = max(tc_min, (tgt // bytes_per_chan) // sub * sub)
    if tc >= c:
        # Keep >= 2 channel tiles when possible so both v7x cores get work.
        tc = _round_up(_cdiv(c, 2), sub) if c >= 2 * sub else c
    tc = min(tc, c)

    kernel = _make_bn_stats_kernel(l, tl)
    cost = pl.CostEstimate(
        flops=int(3 * n * c * l),
        transcendentals=0,
        bytes_accessed=int(n * c * l * itemsize),
    )
    return pl.pallas_call(
        kernel,
        grid=(_cdiv(c, tc), _cdiv(l, tl)),
        in_specs=[pl.BlockSpec((n, tc, tl), lambda j, k: (0, j, k))],
        out_specs=pl.BlockSpec((tc, 2), lambda j, k: (j, 0)),
        out_shape=jax.ShapeDtypeStruct((c, 2), jnp.float32),
        compiler_params=pltpu.CompilerParams(
            dimension_semantics=("parallel", "arbitrary"),
            vmem_limit_bytes=vmem_limit),
        cost_estimate=cost,
    )(x_ncl)


# ----------------------------- op wrappers ------------------------------------

def instance_norm(x_ncl, *, target_block_bytes=None):
    n, c, l = x_ncl.shape
    out = _run_row_kernel(_make_instance_kernel(l), x_ncl.reshape(n * c, l),
                          flops_per_elem=6, transcendentals_per_row=1,
                          target_block_bytes=target_block_bytes)
    return out.reshape(n, c, l)


def filter_response_norm(x_ncl, scale_c, bias_c, tau_c, *, target_block_bytes=None):
    n, c, l = x_ncl.shape
    packed = jnp.tile(
        jnp.stack([scale_c, bias_c, tau_c], axis=-1).astype(jnp.float32), (n, 1))
    out = _run_row_kernel(_make_frn_kernel(l), x_ncl.reshape(n * c, l), packed,
                          flops_per_elem=6, transcendentals_per_row=1,
                          target_block_bytes=target_block_bytes)
    return out.reshape(n, c, l)


def embed_norm(x_ncl, emb_data, w_t, wb, *, target_block_bytes=None):
    n, c, l = x_ncl.shape
    # Tiny (N,E)x(E,2C) matmul badly underfills the MXU: leave it to XLA and
    # pass the resulting per-row (scale, bias) into the streaming kernel.
    param = jnp.dot(emb_data.astype(jnp.float32), w_t,
                    preferred_element_type=jnp.float32) + wb               # (N, 2C)
    scale = param[:, :c] + 1.0                                             # chunk[0] + 1
    bias = param[:, c:]                                                    # chunk[1]
    packed = jnp.stack([scale.reshape(n * c), bias.reshape(n * c)], axis=-1)
    out = _run_row_kernel(_make_embed_kernel(l), x_ncl.reshape(n * c, l), packed,
                          flops_per_elem=7, transcendentals_per_row=2,
                          target_block_bytes=target_block_bytes)
    return out.reshape(n, c, l)


def batch_norm(x_ncl, weight_c, bias_c, *, target_block_bytes=None):
    """Training-mode BatchNorm (batch statistics, biased variance)."""
    n, c, l = x_ncl.shape
    # Pass 1: per-channel sum / sumsq with a bounded (N, tc, tl) block.
    stats = _bn_channel_stats(x_ncl, target_block_bytes)                   # (C, 2)
    inv_nl = 1.0 / float(n * l)
    mean = stats[:, 0] * inv_nl
    var = stats[:, 1] * inv_nl - mean * mean
    a = weight_c.astype(jnp.float32) * lax.rsqrt(var + EPS)
    b = bias_c.astype(jnp.float32) - mean * a
    packed = jnp.tile(jnp.stack([a, b], axis=-1), (n, 1))                  # (N*C, 2)
    # Pass 2: streaming per-row affine.
    out = _run_row_kernel(_affine_kernel, x_ncl.reshape(n * c, l), packed,
                          flops_per_elem=2, transcendentals_per_row=0,
                          target_block_bytes=target_block_bytes)
    return out.reshape(n, c, l)


# ----------------------------- module -----------------------------------------

class NormalizationBlock:
    """JAX/Pallas re-implementation of pero_ocr NormalizationBlock (forward only)."""

    def __init__(self, in_channels, dim, normalization_type, embeddings=None,
                 scale_std=0.1, key=None):
        self.in_channels = in_channels
        self.dim = dim
        self.normalization_type = normalization_type
        c = in_channels
        if key is None:
            key = jax.random.PRNGKey(0)

        if normalization_type == 'batch_norm':
            # PyTorch default affine init: weight=1, bias=0 (training-mode stats).
            self.weight = jnp.ones((c,), jnp.float32)
            self.bias = jnp.zeros((c,), jnp.float32)
        elif normalization_type == 'insta_norm':
            pass  # affine=False by default -> no parameters
        elif normalization_type == 'filter_response_norm':
            self.scale = jnp.ones((c,), jnp.float32)
            self.bias = jnp.zeros((c,), jnp.float32)
            self.tau = jnp.zeros((c,), jnp.float32)
        elif normalization_type == 'embed_norm':
            self.embeddings = embeddings
            e = embeddings['dim']
            # Conv{1,2}d(e, 2c, k=1): uniform(-1/sqrt(e), 1/sqrt(e)) weight,
            # rescaled by scale_std/0.6, bias zeroed.  Stored transposed (e, 2c).
            bound = 1.0 / float(e) ** 0.5
            w = jax.random.uniform(key, (2 * c, e), jnp.float32, -bound, bound)
            self.conv_w_t = (w * (scale_std / 0.6)).T          # (e, 2c)
            self.conv_b = jnp.zeros((2 * c,), jnp.float32)
        else:
            raise Exception(f'Not implemented normalization: "{normalization_type}"')

    def __call__(self, x):
        # x: (N, C, L) for dim=1, (N, C, H, W) for dim=2 (PyTorch NCHW)
        orig_shape = x.shape
        n, c = x.shape[0], x.shape[1]
        x_ncl = x.reshape(n, c, -1)
        t = self.normalization_type
        if t == 'batch_norm':
            out = batch_norm(x_ncl, self.weight, self.bias)
        elif t == 'insta_norm':
            out = instance_norm(x_ncl)
        elif t == 'filter_response_norm':
            out = filter_response_norm(x_ncl, self.scale, self.bias, self.tau)
        elif t == 'embed_norm':
            out = embed_norm(x_ncl, self.embeddings['data'],
                             self.conv_w_t, self.conv_b)
        return out.reshape(orig_shape)


# ----------------------------- main / checks ----------------------------------

if __name__ == "__main__":
    key = jax.random.PRNGKey(0)
    kx, kw, ke, kx2, kx3 = jax.random.split(key, 5)

    N, C, H, W = 2, 4, 16, 16
    E = 8
    x = jax.random.normal(kx, (N, C, H, W), jnp.float32)
    emb_data = jax.random.normal(ke, (N, E), jnp.float32)
    embeddings = {'dim': E, 'data': emb_data}

    outs = {}
    blocks = {}
    for norm_type in ['batch_norm', 'insta_norm', 'filter_response_norm', 'embed_norm']:
        block = NormalizationBlock(C, 2, norm_type, embeddings=embeddings, key=kw)
        y = jax.block_until_ready(block(x))
        assert y.shape == x.shape and y.dtype == x.dtype
        outs[norm_type] = y.reshape(N, C, -1)
        blocks[norm_type] = block

    # Pure-JAX references (on the flattened (N, C, L) view).
    xf = x.reshape(N, C, -1)

    m = xf.mean(axis=(0, 2), keepdims=True)
    v = ((xf - m) ** 2).mean(axis=(0, 2), keepdims=True)
    ref_bn = (xf - m) * lax.rsqrt(v + EPS)

    m_i = xf.mean(axis=2, keepdims=True)
    v_i = ((xf - m_i) ** 2).mean(axis=2, keepdims=True)
    ref_in = (xf - m_i) * lax.rsqrt(v_i + EPS)

    nu2 = (xf * xf).mean(axis=2, keepdims=True)
    ref_frn = jnp.maximum(xf * lax.rsqrt(nu2 + EPS), 0.0)

    blk_e = blocks['embed_norm']
    param = emb_data @ blk_e.conv_w_t + blk_e.conv_b
    sc = (param[:, :C] + 1.0)[:, :, None]
    bi = param[:, C:][:, :, None]
    std_u = jnp.sqrt(((xf - m_i) ** 2).sum(axis=2, keepdims=True) / (xf.shape[2] - 1))
    ref_en = (xf - m_i) / (std_u + EPS) * sc + bi

    assert jnp.allclose(outs['batch_norm'], ref_bn, atol=1e-4, rtol=1e-4)
    assert jnp.allclose(outs['insta_norm'], ref_in, atol=1e-4, rtol=1e-4)
    assert jnp.allclose(outs['filter_response_norm'], ref_frn, atol=1e-4, rtol=1e-4)
    assert jnp.allclose(outs['embed_norm'], ref_en, atol=1e-4, rtol=1e-4)

    # Unaligned spatial size (L = 100, not a multiple of 128): block last dim is
    # the true L (full-dim block), no host-side padding or correction terms.
    x2 = jax.random.normal(kx2, (N, C, 10, 10), jnp.float32)
    xf2 = x2.reshape(N, C, -1)
    m2 = xf2.mean(axis=2, keepdims=True)
    v2 = ((xf2 - m2) ** 2).mean(axis=2, keepdims=True)
    ref2_in = (xf2 - m2) * lax.rsqrt(v2 + EPS)
    y2_in = jax.block_until_ready(
        NormalizationBlock(C, 2, 'insta_norm', embeddings=embeddings, key=kw)(x2))
    assert jnp.allclose(y2_in.reshape(N, C, -1), ref2_in, atol=1e-4, rtol=1e-4)

    blk_e2 = NormalizationBlock(C, 2, 'embed_norm', embeddings=embeddings, key=kw)
    y2_en = jax.block_until_ready(blk_e2(x2))
    param2 = emb_data @ blk_e2.conv_w_t + blk_e2.conv_b
    sc2 = (param2[:, :C] + 1.0)[:, :, None]
    bi2 = param2[:, C:][:, :, None]
    std2 = jnp.sqrt(((xf2 - m2) ** 2).sum(axis=2, keepdims=True) / (xf2.shape[2] - 1))
    ref2_en = (xf2 - m2) / (std2 + EPS) * sc2 + bi2
    assert jnp.allclose(y2_en.reshape(N, C, -1), ref2_en, atol=1e-4, rtol=1e-4)

    blk_bn2 = NormalizationBlock(C, 2, 'batch_norm', embeddings=embeddings, key=kw)
    y2_bn = jax.block_until_ready(blk_bn2(x2))
    m2b = xf2.mean(axis=(0, 2), keepdims=True)
    v2b = ((xf2 - m2b) ** 2).mean(axis=(0, 2), keepdims=True)
    ref2_bn = (xf2 - m2b) * lax.rsqrt(v2b + EPS)
    assert jnp.allclose(y2_bn.reshape(N, C, -1), ref2_bn, atol=1e-4, rtol=1e-4)

    # Force multi-step grids (tiny target block): exercises the partial row /
    # channel blocks, the masked L tail, and the pl.when accumulator path.
    x3 = jax.random.normal(kx3, (2, 12, 4, 33), jnp.float32)   # C=12, L=132
    xf3 = x3.reshape(2, 12, -1)
    w3 = jnp.linspace(0.5, 1.5, 12, dtype=jnp.float32)
    b3 = jnp.linspace(-0.3, 0.3, 12, dtype=jnp.float32)
    m3 = xf3.mean(axis=(0, 2), keepdims=True)
    v3 = ((xf3 - m3) ** 2).mean(axis=(0, 2), keepdims=True)
    ref3_bn = (xf3 - m3) * lax.rsqrt(v3 + EPS) * w3[None, :, None] + b3[None, :, None]
    y3_bn = jax.block_until_ready(batch_norm(xf3, w3, b3, target_block_bytes=4096))
    assert jnp.allclose(y3_bn, ref3_bn, atol=1e-4, rtol=1e-4)

    m3i = xf3.mean(axis=2, keepdims=True)
    v3i = ((xf3 - m3i) ** 2).mean(axis=2, keepdims=True)
    ref3_in = (xf3 - m3i) * lax.rsqrt(v3i + EPS)
    y3_in = jax.block_until_ready(instance_norm(xf3, target_block_bytes=4096))
    assert jnp.allclose(y3_in, ref3_in, atol=1e-4, rtol=1e-4)

    # bfloat16 input exercises the in-kernel f32 accumulation / cast-back path
    # and the bf16 (16-row) sublane-packing block granularity.
    xb = x.astype(jnp.bfloat16)
    yb = jax.block_until_ready(
        NormalizationBlock(C, 2, 'filter_response_norm')(xb))
    assert yb.shape == xb.shape and yb.dtype == jnp.bfloat16
    assert bool(jnp.all(jnp.isfinite(yb.astype(jnp.float32))))

    print("KERNEL_OK")
</pallas_src>

<mosaic_0001>
module attributes {stable_mosaic.version = 11 : i64} {
  func.func @kernel(%arg0: i32, %arg1: i32, %arg2: memref<2x4x256xf32, #tpu.memory_space<vmem>>, %arg3: memref<4x2xf32, #tpu.memory_space<vmem>>) attributes {dimension_semantics = [#tpu.dimension_semantics<parallel>, #tpu.dimension_semantics<arbitrary>], iteration_bounds = array<i64: 1, 1>, scalar_prefetch = 0 : i64, scratch_operands = 0 : i64, tpu.core_type = #tpu.core_type<tc>, window_params = [{transform_indices = @transform_0, window_bounds = array<i64: 2, 4, 256>}, {transform_indices = @transform_1, window_bounds = array<i64: 4, 2>}]} {
    %c0_i32 = arith.constant 0 : i32
    %0 = arith.cmpi eq, %arg1, %c0_i32 : i32
    %1 = arith.extui %0 : i1 to i32
    %c0_i32_0 = arith.constant 0 : i32
    %2 = arith.cmpi ne, %1, %c0_i32_0 : i32
    scf.if %2 {
      %cst_8 = arith.constant 0.000000e+00 : f32
      %13 = vector.broadcast %cst_8 : f32 to vector<4x2xf32>
      %c0_9 = arith.constant 0 : index
      %c0_10 = arith.constant 0 : index
      %14 = vector.load %arg3[%c0_9, %c0_10] : memref<4x2xf32, #tpu.memory_space<vmem>>, vector<4x2xf32>
      tpu.vector_store %arg3[%c0_9, %c0_10], %13 {strides = array<i32>} : memref<4x2xf32, #tpu.memory_space<vmem>>, vector<4x2xf32>,
    } else {
    }
    %c0 = arith.constant 0 : index
    %c0_1 = arith.constant 0 : index
    %c0_2 = arith.constant 0 : index
    %3 = vector.load %arg2[%c0, %c0_1, %c0_2] : memref<2x4x256xf32, #tpu.memory_space<vmem>>, vector<2x4x256xf32>
    %cst = arith.constant dense<0.000000e+00> : vector<4xf32>
    %4 = vector.multi_reduction <add>, %3, %cst [0, 2] : vector<2x4x256xf32> to vector<4xf32>
    %5 = arith.mulf %3, %3 : vector<2x4x256xf32>
    %cst_3 = arith.constant dense<0.000000e+00> : vector<4xf32>
    %6 = vector.multi_reduction <add>, %5, %cst_3 [0, 2] : vector<2x4x256xf32> to vector<4xf32>
    %c0_4 = arith.constant 0 : index
    %c0_5 = arith.constant 0 : index
    %7 = vector.load %arg3[%c0_4, %c0_5] : memref<4x2xf32, #tpu.memory_space<vmem>>, vector<4x2xf32>
    %8 = vector.shape_cast %4 : vector<4xf32> to vector<4x1xf32>
    %9 = vector.shape_cast %6 : vector<4xf32> to vector<4x1xf32>
    %10 = tpu.concatenate %8, %9 in 1 : vector<4x1xf32>, vector<4x1xf32> -> vector<4x2xf32>
    %11 = arith.addf %7, %10 : vector<4x2xf32>
    %c0_6 = arith.constant 0 : index
    %c0_7 = arith.constant 0 : index
    %12 = vector.load %arg3[%c0_6, %c0_7] : memref<4x2xf32, #tpu.memory_space<vmem>>, vector<4x2xf32>
    tpu.vector_store %arg3[%c0_6, %c0_7], %11 {strides = array<i32>} : memref<4x2xf32, #tpu.memory_space<vmem>>, vector<4x2xf32>,
    return
  }
  func.func @transform_0(%arg0: i32, %arg1: i32) -> (i32, i32, i32) {
    %c0_i32 = arith.constant 0 : i32
    %c0_i32_0 = arith.constant 0 : i32
    return %c0_i32, %arg0, %arg1 : i32, i32, i32
  }
  func.func @transform_1(%arg0: i32, %arg1: i32) -> (i32, i32) {
    %c0_i32 = arith.constant 0 : i32
    %c0_i32_0 = arith.constant 0 : i32
    return %arg0, %c0_i32 : i32, i32
  }
}

</mosaic_0001>

<llo_original>
// kernel: tpu_custom_call.1
$region0: #{tpu_custom_call.1}
  #allocation0 [shape = 'u32[]', space=smem, size = 0x4, offset = 0x4, fixed_abs, tag = 'smem constant byte address 0x4 - core index']
  #allocation1 [shape = 'u32[144,128]{1,0:T(1,128)}', space=vmem, size = 0x12000, scoped, tag = 'internal scratch']
  %s0 = inlined_call_operand.hbm [shape: f32[2,4,256], index: 0, kind: input, shape index: {}]
  %s1 = inlined_call_operand.vmem [shape: f32[4,2], index: 1, kind: output, shape index: {}]
  %s2 = sld [smem:[#allocation0]]
  $region22: #{tpu_custom_call.1} parent=0
    _
  %s4 = ssub.s32 1, %s2
  %s5 = scalar_select 0, %s4, %s2
  $region1: #{tpu_custom_call.1} parent=0
    #allocation2 [shape = 'u8[8192]{0}', space=vmem, size = 0x2000, scoped, tag = 'input window, operand 0, single buffered']
    #allocation3 [shape = 's32[1]{0}', space=sflag, size = 0x4, scoped, tag = 'scoped memory for tpu_custom_call.1']
    %6 = vsyncpa [#allocation3], 0
    // Predicated region
    $region2: #{tpu_custom_call.1} parent=1 // pred_check
      _
    $region3: #{tpu_custom_call.1} parent=1 // pred_check_branch
      %8 = sbr.rel (0) target = $region5
    $region4: #{tpu_custom_call.1} parent=1 // pred_region
      %s10 = ssub.s32 256, 256
      %11 = vsyncadd [#allocation3], %s10
      %s12 = sshll.u32 [#allocation2], 4
      %s13 = int_to_ptr.vmem [resolvable:$true] %s12
      %18 = dma.hbm_to_vmem [thread:$0]  %s0, 256, %s13, [#allocation3], 128, 128, 8
    $region5: #{tpu_custom_call.1} parent=1 // pred_fallthru
      _
    // Predicated region
    $region6: #{tpu_custom_call.1} parent=1 // pred_check
      _
    $region7: #{tpu_custom_call.1} parent=1 // pred_check_branch
      %20 = sbr.rel (0) target = $region9
    $region8: #{tpu_custom_call.1} parent=1 // pred_region
      %21 = dma.done [#allocation3], 256
    $region9: #{tpu_custom_call.1} parent=1 // pred_fallthru
      _
    %p22 = scmp.eq.s32.totalorder 0, 0
    // Predicated region
    $region10: #{tpu_custom_call.1} parent=1 // pred_check
      %p23 = pneg %p22
    $region11: #{tpu_custom_call.1} parent=1 // pred_check_branch
      %25 = sbr.rel (%p23) target = $region13
    $region12: #{tpu_custom_call.1} parent=1 // pred_region
      %vm26 = vcmask 11264
      %27 = vst.msk [vmem:[%s1] sm:$0xf] %vm26, 0.0
    $region13: #{tpu_custom_call.1} parent=1 // pred_fallthru
      _
    %v28 = vld [vmem:[#allocation2] sm:$0xff]
    %v29 = vld [vmem:[#allocation2 + $0x8] sm:$0xff]
    %v32 = vcombine.high %v28, %v28
    %v33 = vcombine.high %v29, %v29
    %vm36 = vcmask 1043456
    %v37 = vsel %vm36, %v28, 0.0
    %v38 = vsel %vm36, %v32, 0.0
    %v39 = vadd.f32 %v37, %v38
    %v40 = vsel %vm36, %v29, 0.0
    %v41 = vadd.f32 %v39, %v40
    %v42 = vsel %vm36, %v33, 0.0
    %v43 = vadd.f32 %v41, %v42
    %44 = vadd.xlane.f32.xlu0 %v43
    %v45 = vpop.xlane.xlu0 %44
    %v46 = vmul.f32 %v28, %v28
    %v47 = vmul.f32 %v29, %v29
    %v50 = vcombine.high %v46, %v46
    %v51 = vcombine.high %v47, %v47
    %v54 = vsel %vm36, %v46, 0.0
    %v55 = vsel %vm36, %v50, 0.0
    %v56 = vadd.f32 %v54, %v55
    %v57 = vsel %vm36, %v47, 0.0
    %v58 = vadd.f32 %v56, %v57
    %v59 = vsel %vm36, %v51, 0.0
    %v60 = vadd.f32 %v58, %v59
    %61 = vadd.xlane.f32.xlu0 %v60
    %v62 = vpop.xlane.xlu0 %61
    %v63 = vld [vmem:[%s1] sm:$0xf]
    %vm64 = vcmask 7168
    %v65 = vsel %vm64, %v45, %v62
    %v66 = vadd.f32 %v63, %v65
    %vm67 = vcmask 11264
    %68 = vst.msk [vmem:[%s1] sm:$0xf] %vm67, %v66
    // Predicated region
    $region14: #{tpu_custom_call.1} parent=1 // pred_check
      _
    $region15: #{tpu_custom_call.1} parent=1 // pred_check_branch
      %70 = sbr.rel (0) target = $region17
    $region16: #{tpu_custom_call.1} parent=1 // pred_region
      _
    $region17: #{tpu_custom_call.1} parent=1 // pred_fallthru
      _
    // Predicated region
    $region18: #{tpu_custom_call.1} parent=1 // pred_check
      _
    $region19: #{tpu_custom_call.1} parent=1 // pred_check_branch
      %72 = sbr.rel (0) target = $region21
    $region20: #{tpu_custom_call.1} parent=1 // pred_region
      _
    $region21: #{tpu_custom_call.1} parent=1 // pred_fallthru
      _
    %73 = vsyncpa [#allocation3], 1

</llo_original>
